<compile_context>
chip_gen: v6e
topology: v6e:2x2x1
jax: 0.10.0
libtpu: 0.0.40
codegen_flags: <defaults>
</compile_context>

<pallas_src>
import jax
import jax.numpy as jnp
from jax.experimental import pallas as pl
from jax.experimental.pallas import tpu as pltpu

SUBLANE = 8


def _round_up(n, m):
    return ((n + m - 1) // m) * m


def _choose_tb(B):
    """Batch tile: ~512 rows per tile, at least 2 tiles when B >= 16 so
    dimension_semantics=("parallel",) can shard across both v7x TensorCores,
    rounded to the 8-row sublane quantum. The final (possibly partial) tile is
    handled by Pallas' out-of-bounds masking (no batch padding in HBM)."""
    if B < 16:
        return B                      # single tile; block == full batch dim
    n_tiles = max(2, pl.cdiv(B, 512))
    return _round_up(pl.cdiv(B, n_tiles), SUBLANE)


def vae_kernel(
    x_ref,      # (TB, F)   bf16  input tile (true F, no padding)
    w1_ref,     # (F, H)    bf16  encoder fc1
    b1_ref,     # (1, H)    f32
    wmv_ref,    # (H, 2L)   bf16  fused fc_mean | fc_log_var
    bmv_ref,    # (1, 2L)   f32
    eps_ref,    # (TB, L)   f32   standard-normal noise
    w2_ref,     # (L, H)    bf16  decoder fc2
    b2_ref,     # (1, H)    f32
    w3_ref,     # (H, F)    bf16  decoder fc3
    b3_ref,     # (1, F)    f32
    xhat_ref,   # (TB, F)   bf16  out: reconstruction
    mv_ref,     # (TB, 2L)  f32   out: packed mean | log_var
):
    L = eps_ref.shape[-1]

    # ---------------- encoder ----------------
    h1 = jnp.tanh(
        jnp.dot(x_ref[...].astype(jnp.bfloat16), w1_ref[...],
                preferred_element_type=jnp.float32) + b1_ref[...]
    )

    # fused fc_mean | fc_log_var: one (H, 2L) matmul, split columns afterwards
    mv = jnp.dot(h1.astype(jnp.bfloat16), wmv_ref[...],
                 preferred_element_type=jnp.float32) + bmv_ref[...]
    mean = mv[:, :L]
    log_var = mv[:, L:]

    # reparameterization: z = mean + exp(0.5 * log_var) * eps
    z = mean + jnp.exp(0.5 * log_var) * eps_ref[...]

    # ---------------- decoder ----------------
    h2 = jnp.tanh(
        jnp.dot(z.astype(jnp.bfloat16), w2_ref[...],
                preferred_element_type=jnp.float32) + b2_ref[...]
    )
    x_hat = jnp.dot(h2.astype(jnp.bfloat16), w3_ref[...],
                    preferred_element_type=jnp.float32) + b3_ref[...]

    xhat_ref[...] = x_hat.astype(xhat_ref.dtype)
    mv_ref[...] = mv


def prepare_params(params):
    """One-time weight prep: fuse fc_mean|fc_log_var and cast matmul weights to
    bf16. Call once and reuse across forwards (hoisted out of the per-call path)."""
    w1 = params["w1"].astype(jnp.bfloat16)
    b1 = params["b1"].astype(jnp.float32)
    wmv = jnp.concatenate([params["wm"], params["wv"]], axis=1).astype(jnp.bfloat16)
    bmv = jnp.concatenate([params["bm"], params["bv"]], axis=1).astype(jnp.float32)
    w2 = params["w2"].astype(jnp.bfloat16)
    b2 = params["b2"].astype(jnp.float32)
    w3 = params["w3"].astype(jnp.bfloat16)
    b3 = params["b3"].astype(jnp.float32)
    return (w1, b1, wmv, bmv, w2, b2, w3, b3)


def simple_vae_forward(x, prepared, eps):
    """x: (B, F) bf16 (or f32); prepared: output of prepare_params; eps: (B, L) f32.
    Returns (x_hat (B,F) in x.dtype, mean (B,L) f32, log_var (B,L) f32)."""
    B, F = x.shape
    w1, b1, wmv, bmv, w2, b2, w3, b3 = prepared
    H = w1.shape[1]
    L2 = wmv.shape[1]
    L = L2 // 2

    TB = _choose_tb(B)
    grid = (pl.cdiv(B, TB),)

    resident = lambda i: (0, 0)   # weights/biases: same block every step -> stay in VMEM
    batched = lambda i: (i, 0)    # x / eps / outputs: tiled over the batch grid

    x_hat, mv = pl.pallas_call(
        vae_kernel,
        out_shape=(
            jax.ShapeDtypeStruct((B, F), x.dtype),        # x_hat (true shape, bf16 I/O)
            jax.ShapeDtypeStruct((B, L2), jnp.float32),   # packed mean | log_var
        ),
        grid=grid,
        in_specs=[
            pl.BlockSpec((TB, F), batched),      # x
            pl.BlockSpec((F, H), resident),      # w1
            pl.BlockSpec((1, H), resident),      # b1
            pl.BlockSpec((H, L2), resident),     # wmv
            pl.BlockSpec((1, L2), resident),     # bmv
            pl.BlockSpec((TB, L), batched),      # eps
            pl.BlockSpec((L, H), resident),      # w2
            pl.BlockSpec((1, H), resident),      # b2
            pl.BlockSpec((H, F), resident),      # w3
            pl.BlockSpec((1, F), resident),      # b3
        ],
        out_specs=(
            pl.BlockSpec((TB, F), batched),
            pl.BlockSpec((TB, L2), batched),
        ),
        compiler_params=pltpu.CompilerParams(
            dimension_semantics=("parallel",),   # shard batch tiles across TCs on v7x
        ),
    )(x, w1, b1, wmv, bmv, eps, w2, b2, w3, b3)

    mean = mv[:, :L]
    log_var = mv[:, L:]
    return x_hat, mean, log_var


def init_params(key, F=513, H=128, L=16):
    """Deterministic synthetic parameters, stored (in, out) so the kernel does x @ W + b."""
    ks = jax.random.split(key, 10)

    def lin(kw, kb, fan_in, fan_out):
        # torch.nn.Linear default init: U(-1/sqrt(fan_in), 1/sqrt(fan_in))
        bound = 1.0 / jnp.sqrt(fan_in)
        w = jax.random.uniform(kw, (fan_in, fan_out), jnp.float32, -bound, bound)
        b = jax.random.uniform(kb, (1, fan_out), jnp.float32, -bound, bound)
        return w, b

    w1, b1 = lin(ks[0], ks[1], F, H)   # encoder fc1
    wm, bm = lin(ks[2], ks[3], H, L)   # fc_mean
    wv, bv = lin(ks[4], ks[5], H, L)   # fc_log_var
    w2, b2 = lin(ks[6], ks[7], L, H)   # decoder fc2
    w3, b3 = lin(ks[8], ks[9], H, F)   # decoder fc3

    return dict(w1=w1, b1=b1, wm=wm, bm=bm, wv=wv, bv=bv,
                w2=w2, b2=b2, w3=w3, b3=b3)


def reference_forward(x, params, eps):
    """Pure-JAX reference using the same bf16 matmul quantization as the kernel."""
    bf = lambda a: a.astype(jnp.bfloat16)
    dot = lambda a, b: jnp.dot(bf(a), bf(b), preferred_element_type=jnp.float32)
    h1 = jnp.tanh(dot(x, params["w1"]) + params["b1"])
    mean = dot(h1, params["wm"]) + params["bm"]
    log_var = dot(h1, params["wv"]) + params["bv"]
    z = mean + jnp.exp(0.5 * log_var) * eps
    h2 = jnp.tanh(dot(z, params["w2"]) + params["b2"])
    x_hat = dot(h2, params["w3"]) + params["b3"]
    return x_hat, mean, log_var


if __name__ == "__main__":
    F_DIM, H_DIM, L_DIM = 513, 128, 16
    B = 8

    key = jax.random.PRNGKey(0)
    k_param, k_x, k_eps = jax.random.split(key, 3)

    params = init_params(k_param, F=F_DIM, H=H_DIM, L=L_DIM)
    prepared = prepare_params(params)          # one-time weight prep (hoisted)

    # Producer emits bf16 directly (the kernel uses bf16 for the MXU anyway).
    x = jax.random.normal(k_x, (B, F_DIM), dtype=jnp.bfloat16)
    eps = jax.random.normal(k_eps, (B, L_DIM), dtype=jnp.float32)

    x_hat, mean, log_var = simple_vae_forward(x, prepared, eps)
    jax.block_until_ready((x_hat, mean, log_var))

    # sanity check against pure-JAX reference (same bf16 matmul precision)
    rx, rm, rv = reference_forward(x, params, eps)
    assert x_hat.shape == (B, F_DIM) and mean.shape == (B, L_DIM) and log_var.shape == (B, L_DIM)
    assert jnp.allclose(x_hat.astype(jnp.float32), rx, atol=2e-2, rtol=2e-2)
    assert jnp.allclose(mean, rm, atol=1e-2, rtol=1e-2)
    assert jnp.allclose(log_var, rv, atol=1e-2, rtol=1e-2)

    print("KERNEL_OK")
</pallas_src>

<mosaic_0001>
module attributes {stable_mosaic.version = 11 : i64} {
  func.func @vae_kernel(%arg0: i32, %arg1: memref<8x513xbf16, #tpu.memory_space<vmem>>, %arg2: memref<513x128xbf16, #tpu.memory_space<vmem>>, %arg3: memref<1x128xf32, #tpu.memory_space<vmem>>, %arg4: memref<128x32xbf16, #tpu.memory_space<vmem>>, %arg5: memref<1x32xf32, #tpu.memory_space<vmem>>, %arg6: memref<8x16xf32, #tpu.memory_space<vmem>>, %arg7: memref<16x128xbf16, #tpu.memory_space<vmem>>, %arg8: memref<1x128xf32, #tpu.memory_space<vmem>>, %arg9: memref<128x513xbf16, #tpu.memory_space<vmem>>, %arg10: memref<1x513xf32, #tpu.memory_space<vmem>>, %arg11: memref<8x513xbf16, #tpu.memory_space<vmem>>, %arg12: memref<8x32xf32, #tpu.memory_space<vmem>>) attributes {dimension_semantics = [#tpu.dimension_semantics<parallel>], iteration_bounds = array<i64: 1>, scalar_prefetch = 0 : i64, scratch_operands = 0 : i64, tpu.core_type = #tpu.core_type<tc>, window_params = [{transform_indices = @transform_0, window_bounds = array<i64: 8, 513>}, {pipeline_mode = #tpu.pipeline_mode<synchronous>, transform_indices = @transform_1, window_bounds = array<i64: 513, 128>}, {pipeline_mode = #tpu.pipeline_mode<synchronous>, transform_indices = @transform_2, window_bounds = array<i64: 1, 128>}, {pipeline_mode = #tpu.pipeline_mode<synchronous>, transform_indices = @transform_3, window_bounds = array<i64: 128, 32>}, {pipeline_mode = #tpu.pipeline_mode<synchronous>, transform_indices = @transform_4, window_bounds = array<i64: 1, 32>}, {transform_indices = @transform_5, window_bounds = array<i64: 8, 16>}, {pipeline_mode = #tpu.pipeline_mode<synchronous>, transform_indices = @transform_6, window_bounds = array<i64: 16, 128>}, {pipeline_mode = #tpu.pipeline_mode<synchronous>, transform_indices = @transform_7, window_bounds = array<i64: 1, 128>}, {pipeline_mode = #tpu.pipeline_mode<synchronous>, transform_indices = @transform_8, window_bounds = array<i64: 128, 513>}, {pipeline_mode = #tpu.pipeline_mode<synchronous>, transform_indices = @transform_9, window_bounds = array<i64: 1, 513>}, {transform_indices = @transform_10, window_bounds = array<i64: 8, 513>}, {transform_indices = @transform_11, window_bounds = array<i64: 8, 32>}]} {
    %c0 = arith.constant 0 : index
    %c0_0 = arith.constant 0 : index
    %0 = vector.load %arg1[%c0, %c0_0] : memref<8x513xbf16, #tpu.memory_space<vmem>>, vector<8x513xbf16>
    %c0_1 = arith.constant 0 : index
    %c0_2 = arith.constant 0 : index
    %1 = vector.load %arg2[%c0_1, %c0_2] : memref<513x128xbf16, #tpu.memory_space<vmem>>, vector<513x128xbf16>
    %cst = arith.constant dense<0.000000e+00> : vector<8x128xf32>
    %2 = tpu.matmul %0, %1, %cst {dimension_numbers = #tpu.dot_dimension_numbers<[1], [0], [0], [1], [0, 0, 1, 1], [], []>} : vector<8x513xbf16>, vector<513x128xbf16>, vector<8x128xf32> -> vector<8x128xf32>
    %c0_3 = arith.constant 0 : index
    %c0_4 = arith.constant 0 : index
    %3 = vector.load %arg3[%c0_3, %c0_4] : memref<1x128xf32, #tpu.memory_space<vmem>>, vector<1x128xf32>
    %4 = vector.broadcast %3 : vector<1x128xf32> to vector<8x128xf32>
    %5 = arith.addf %2, %4 : vector<8x128xf32>
    %6 = math.tanh %5 : vector<8x128xf32>
    %7 = arith.truncf %6 : vector<8x128xf32> to vector<8x128xbf16>
    %c0_5 = arith.constant 0 : index
    %c0_6 = arith.constant 0 : index
    %8 = vector.load %arg4[%c0_5, %c0_6] : memref<128x32xbf16, #tpu.memory_space<vmem>>, vector<128x32xbf16>
    %cst_7 = arith.constant dense<0.000000e+00> : vector<8x32xf32>
    %9 = tpu.matmul %7, %8, %cst_7 {dimension_numbers = #tpu.dot_dimension_numbers<[1], [0], [0], [1], [0, 0, 1, 1], [], []>} : vector<8x128xbf16>, vector<128x32xbf16>, vector<8x32xf32> -> vector<8x32xf32>
    %c0_8 = arith.constant 0 : index
    %c0_9 = arith.constant 0 : index
    %10 = vector.load %arg5[%c0_8, %c0_9] : memref<1x32xf32, #tpu.memory_space<vmem>>, vector<1x32xf32>
    %11 = vector.broadcast %10 : vector<1x32xf32> to vector<8x32xf32>
    %12 = arith.addf %9, %11 : vector<8x32xf32>
    %13 = vector.extract_strided_slice %12 {offsets = [0, 0], sizes = [8, 16], strides = [1, 1]} : vector<8x32xf32> to vector<8x16xf32>
    %14 = vector.extract_strided_slice %12 {offsets = [0, 16], sizes = [8, 16], strides = [1, 1]} : vector<8x32xf32> to vector<8x16xf32>
    %cst_10 = arith.constant 5.000000e-01 : f32
    %15 = vector.broadcast %cst_10 : f32 to vector<8x16xf32>
    %16 = arith.mulf %15, %14 : vector<8x16xf32>
    %17 = math.exp %16 : vector<8x16xf32>
    %c0_11 = arith.constant 0 : index
    %c0_12 = arith.constant 0 : index
    %18 = vector.load %arg6[%c0_11, %c0_12] : memref<8x16xf32, #tpu.memory_space<vmem>>, vector<8x16xf32>
    %19 = arith.mulf %17, %18 : vector<8x16xf32>
    %20 = arith.addf %13, %19 : vector<8x16xf32>
    %21 = arith.truncf %20 : vector<8x16xf32> to vector<8x16xbf16>
    %c0_13 = arith.constant 0 : index
    %c0_14 = arith.constant 0 : index
    %22 = vector.load %arg7[%c0_13, %c0_14] : memref<16x128xbf16, #tpu.memory_space<vmem>>, vector<16x128xbf16>
    %cst_15 = arith.constant dense<0.000000e+00> : vector<8x128xf32>
    %23 = tpu.matmul %21, %22, %cst_15 {dimension_numbers = #tpu.dot_dimension_numbers<[1], [0], [0], [1], [0, 0, 1, 1], [], []>} : vector<8x16xbf16>, vector<16x128xbf16>, vector<8x128xf32> -> vector<8x128xf32>
    %c0_16 = arith.constant 0 : index
    %c0_17 = arith.constant 0 : index
    %24 = vector.load %arg8[%c0_16, %c0_17] : memref<1x128xf32, #tpu.memory_space<vmem>>, vector<1x128xf32>
    %25 = vector.broadcast %24 : vector<1x128xf32> to vector<8x128xf32>
    %26 = arith.addf %23, %25 : vector<8x128xf32>
    %27 = math.tanh %26 : vector<8x128xf32>
    %28 = arith.truncf %27 : vector<8x128xf32> to vector<8x128xbf16>
    %c0_18 = arith.constant 0 : index
    %c0_19 = arith.constant 0 : index
    %29 = vector.load %arg9[%c0_18, %c0_19] : memref<128x513xbf16, #tpu.memory_space<vmem>>, vector<128x513xbf16>
    %cst_20 = arith.constant dense<0.000000e+00> : vector<8x513xf32>
    %30 = tpu.matmul %28, %29, %cst_20 {dimension_numbers = #tpu.dot_dimension_numbers<[1], [0], [0], [1], [0, 0, 1, 1], [], []>} : vector<8x128xbf16>, vector<128x513xbf16>, vector<8x513xf32> -> vector<8x513xf32>
    %c0_21 = arith.constant 0 : index
    %c0_22 = arith.constant 0 : index
    %31 = vector.load %arg10[%c0_21, %c0_22] : memref<1x513xf32, #tpu.memory_space<vmem>>, vector<1x513xf32>
    %32 = vector.broadcast %31 : vector<1x513xf32> to vector<8x513xf32>
    %33 = arith.addf %30, %32 : vector<8x513xf32>
    %34 = arith.truncf %33 : vector<8x513xf32> to vector<8x513xbf16>
    %c0_23 = arith.constant 0 : index
    %c0_24 = arith.constant 0 : index
    %35 = vector.load %arg11[%c0_23, %c0_24] : memref<8x513xbf16, #tpu.memory_space<vmem>>, vector<8x513xbf16>
    tpu.vector_store %arg11[%c0_23, %c0_24], %34 {strides = array<i32>} : memref<8x513xbf16, #tpu.memory_space<vmem>>, vector<8x513xbf16>,
    %c0_25 = arith.constant 0 : index
    %c0_26 = arith.constant 0 : index
    %36 = vector.load %arg12[%c0_25, %c0_26] : memref<8x32xf32, #tpu.memory_space<vmem>>, vector<8x32xf32>
    tpu.vector_store %arg12[%c0_25, %c0_26], %12 {strides = array<i32>} : memref<8x32xf32, #tpu.memory_space<vmem>>, vector<8x32xf32>,
    return
  }
  func.func @transform_0(%arg0: i32) -> (i32, i32) {
    %c0_i32 = arith.constant 0 : i32
    %c0_i32_0 = arith.constant 0 : i32
    return %arg0, %c0_i32 : i32, i32
  }
  func.func @transform_1(%arg0: i32) -> (i32, i32) {
    %c0_i32 = arith.constant 0 : i32
    %c0_i32_0 = arith.constant 0 : i32
    %c0_i32_1 = arith.constant 0 : i32
    return %c0_i32, %c0_i32_0 : i32, i32
  }
  func.func @transform_2(%arg0: i32) -> (i32, i32) {
    %c0_i32 = arith.constant 0 : i32
    %c0_i32_0 = arith.constant 0 : i32
    %c0_i32_1 = arith.constant 0 : i32
    return %c0_i32, %c0_i32_0 : i32, i32
  }
  func.func @transform_3(%arg0: i32) -> (i32, i32) {
    %c0_i32 = arith.constant 0 : i32
    %c0_i32_0 = arith.constant 0 : i32
    %c0_i32_1 = arith.constant 0 : i32
    return %c0_i32, %c0_i32_0 : i32, i32
  }
  func.func @transform_4(%arg0: i32) -> (i32, i32) {
    %c0_i32 = arith.constant 0 : i32
    %c0_i32_0 = arith.constant 0 : i32
    %c0_i32_1 = arith.constant 0 : i32
    return %c0_i32, %c0_i32_0 : i32, i32
  }
  func.func @transform_5(%arg0: i32) -> (i32, i32) {
    %c0_i32 = arith.constant 0 : i32
    %c0_i32_0 = arith.constant 0 : i32
    return %arg0, %c0_i32 : i32, i32
  }
  func.func @transform_6(%arg0: i32) -> (i32, i32) {
    %c0_i32 = arith.constant 0 : i32
    %c0_i32_0 = arith.constant 0 : i32
    %c0_i32_1 = arith.constant 0 : i32
    return %c0_i32, %c0_i32_0 : i32, i32
  }
  func.func @transform_7(%arg0: i32) -> (i32, i32) {
    %c0_i32 = arith.constant 0 : i32
    %c0_i32_0 = arith.constant 0 : i32
    %c0_i32_1 = arith.constant 0 : i32
    return %c0_i32, %c0_i32_0 : i32, i32
  }
  func.func @transform_8(%arg0: i32) -> (i32, i32) {
    %c0_i32 = arith.constant 0 : i32
    %c0_i32_0 = arith.constant 0 : i32
    %c0_i32_1 = arith.constant 0 : i32
    return %c0_i32, %c0_i32_0 : i32, i32
  }
  func.func @transform_9(%arg0: i32) -> (i32, i32) {
    %c0_i32 = arith.constant 0 : i32
    %c0_i32_0 = arith.constant 0 : i32
    %c0_i32_1 = arith.constant 0 : i32
    return %c0_i32, %c0_i32_0 : i32, i32
  }
  func.func @transform_10(%arg0: i32) -> (i32, i32) {
    %c0_i32 = arith.constant 0 : i32
    %c0_i32_0 = arith.constant 0 : i32
    return %arg0, %c0_i32 : i32, i32
  }
  func.func @transform_11(%arg0: i32) -> (i32, i32) {
    %c0_i32 = arith.constant 0 : i32
    %c0_i32_0 = arith.constant 0 : i32
    return %arg0, %c0_i32 : i32, i32
  }
}

</mosaic_0001>

<llo_original>
// kernel: tpu_custom_call.1
$region0: #{tpu_custom_call.1}
  #allocation0 [shape = 'u32[]', space=smem, size = 0x4, offset = 0x4, fixed_abs, tag = 'smem constant byte address 0x4 - core index']
  #allocation1 [shape = 'u32[144,128]{1,0:T(1,128)}', space=vmem, size = 0x12000, scoped, tag = 'internal scratch']
  %s0 = inlined_call_operand.vmem [shape: bf16[8,513], index: 0, kind: input, shape index: {}]
  %s1 = inlined_call_operand.vmem [shape: bf16[513,128], index: 1, kind: input, shape index: {}]
  %s2 = inlined_call_operand.vmem [shape: f32[1,128], index: 2, kind: input, shape index: {}]
  %s3 = inlined_call_operand.vmem [shape: bf16[128,32], index: 3, kind: input, shape index: {}]
  %s4 = inlined_call_operand.vmem [shape: f32[1,32], index: 4, kind: input, shape index: {}]
  %s5 = inlined_call_operand.vmem [shape: f32[8,16], index: 5, kind: input, shape index: {}]
  %s6 = inlined_call_operand.vmem [shape: bf16[16,128], index: 6, kind: input, shape index: {}]
  %s7 = inlined_call_operand.vmem [shape: f32[1,128], index: 7, kind: input, shape index: {}]
  %s8 = inlined_call_operand.vmem [shape: bf16[128,513], index: 8, kind: input, shape index: {}]
  %s9 = inlined_call_operand.vmem [shape: f32[1,513], index: 9, kind: input, shape index: {}]
  %s10 = inlined_call_operand.hbm [shape: bf16[8,513], index: 10, kind: output, shape index: {0}]
  %s11 = inlined_call_operand.hbm [shape: f32[8,32], index: 11, kind: output, shape index: {1}]
  %12 = xla_tuple %s10, %s11
  %s13 = sld [smem:[#allocation0]]
  $region58: #{tpu_custom_call.1} parent=0
    _
  %s15 = ssub.s32 1, %s13
  %s16 = scalar_select 0, %s15, %s13
  $region1: #{tpu_custom_call.1} parent=0
    #allocation2 [shape = 'u8[10240]{0}', space=vmem, size = 0x2800, scoped, tag = 'output window, operand 0, single buffered']
    #allocation3 [shape = 's32[1]{0}', space=sflag, size = 0x4, scoped, tag = 'scoped memory for tpu_custom_call.1']
    #allocation4 [shape = 'u8[4096]{0}', space=vmem, size = 0x1000, scoped, tag = 'output window, operand 1, single buffered']
    #allocation5 [shape = 's32[1]{0}', space=sflag, size = 0x4, scoped, tag = 'scoped memory for tpu_custom_call.1']
    %17 = vsyncpa [#allocation3], 0
    %18 = vsyncpa [#allocation5], 0
    // Predicated region
    $region2: #{tpu_custom_call.1} parent=1 // pred_check
      _
    $region3: #{tpu_custom_call.1} parent=1 // pred_check_branch
      %20 = sbr.rel (0) target = $region5
    $region4: #{tpu_custom_call.1} parent=1 // pred_region
      _
    $region5: #{tpu_custom_call.1} parent=1 // pred_fallthru
      _
    // Predicated region
    $region6: #{tpu_custom_call.1} parent=1 // pred_check
      _
    $region7: #{tpu_custom_call.1} parent=1 // pred_check_branch
      %22 = sbr.rel (0) target = $region9
    $region8: #{tpu_custom_call.1} parent=1 // pred_region
      _
    $region9: #{tpu_custom_call.1} parent=1 // pred_fallthru
      _
    // Predicated region
    $region10: #{tpu_custom_call.1} parent=1 // pred_check
      _
    $region11: #{tpu_custom_call.1} parent=1 // pred_check_branch
      %24 = sbr.rel (0) target = $region13
    $region12: #{tpu_custom_call.1} parent=1 // pred_region
      _
    $region13: #{tpu_custom_call.1} parent=1 // pred_fallthru
      _
    // Predicated region
    $region14: #{tpu_custom_call.1} parent=1 // pred_check
      _
    $region15: #{tpu_custom_call.1} parent=1 // pred_check_branch
      %26 = sbr.rel (0) target = $region17
    $region16: #{tpu_custom_call.1} parent=1 // pred_region
      _
    $region17: #{tpu_custom_call.1} parent=1 // pred_fallthru
      _
    // Predicated region
    $region18: #{tpu_custom_call.1} parent=1 // pred_check
      _
    $region19: #{tpu_custom_call.1} parent=1 // pred_check_branch
      %28 = sbr.rel (0) target = $region21
    $region20: #{tpu_custom_call.1} parent=1 // pred_region
      _
    $region21: #{tpu_custom_call.1} parent=1 // pred_fallthru
      _
    // Predicated region
    $region22: #{tpu_custom_call.1} parent=1 // pred_check
      _
    $region23: #{tpu_custom_call.1} parent=1 // pred_check_branch
      %30 = sbr.rel (0) target = $region25
    $region24: #{tpu_custom_call.1} parent=1 // pred_region
      _
    $region25: #{tpu_custom_call.1} parent=1 // pred_fallthru
      _
    // Predicated region
    $region26: #{tpu_custom_call.1} parent=1 // pred_check
      _
    $region27: #{tpu_custom_call.1} parent=1 // pred_check_branch
      %32 = sbr.rel (0) target = $region29
    $region28: #{tpu_custom_call.1} parent=1 // pred_region
      _
    $region29: #{tpu_custom_call.1} parent=1 // pred_fallthru
      _
    // Predicated region
    $region30: #{tpu_custom_call.1} parent=1 // pred_check
      _
    $region31: #{tpu_custom_call.1} parent=1 // pred_check_branch
      %34 = sbr.rel (0) target = $region33
    $region32: #{tpu_custom_call.1} parent=1 // pred_region
      _
    $region33: #{tpu_custom_call.1} parent=1 // pred_fallthru
      _
    // Predicated region
    $region34: #{tpu_custom_call.1} parent=1 // pred_check
      _
    $region35: #{tpu_custom_call.1} parent=1 // pred_check_branch
      %36 = sbr.rel (0) target = $region37
    $region36: #{tpu_custom_call.1} parent=1 // pred_region
      _
    $region37: #{tpu_custom_call.1} parent=1 // pred_fallthru
      _
    // Predicated region
    $region38: #{tpu_custom_call.1} parent=1 // pred_check
      _
    $region39: #{tpu_custom_call.1} parent=1 // pred_check_branch
      %38 = sbr.rel (0) target = $region41
    $region40: #{tpu_custom_call.1} parent=1 // pred_region
      _
    $region41: #{tpu_custom_call.1} parent=1 // pred_fallthru
      _
    %v40 = vld [vmem:[%s0] sm:$0xff]
    %v41 = vld [vmem:[%s0 + $0x8] sm:$0xff]
    %v42 = vld [vmem:[%s0 + $0x10] sm:$0xf]
    %v43 = vld [vmem:[%s1] sm:$0xf]
    %v44 = vld [vmem:[%s1 + $0x4] sm:$0xf]
    %v45 = vld [vmem:[%s1 + $0x8] sm:$0xf]
    %v46 = vld [vmem:[%s1 + $0xc] sm:$0xf]
    %v47 = vld [vmem:[%s1 + $0x10] sm:$0xf]
    %v48 = vld [vmem:[%s1 + $0x14] sm:$0xf]
    %v49 = vld [vmem:[%s1 + $0x18] sm:$0xf]
    %v50 = vld [vmem:[%s1 + $0x1c] sm:$0xf]
    %v51 = vld [vmem:[%s1 + $0x20] sm:$0xf]
    %v52 = vld [vmem:[%s1 + $0x24] sm:$0xf]
    %v53 = vld [vmem:[%s1 + $0x28] sm:$0xf]
    %v54 = vld [vmem:[%s1 + $0x2c] sm:$0xf]
    %v55 = vld [vmem:[%s1 + $0x30] sm:$0xf]
    %v56 = vld [vmem:[%s1 + $0x34] sm:$0xf]
    %v57 = vld [vmem:[%s1 + $0x38] sm:$0xf]
    %v58 = vld [vmem:[%s1 + $0x3c] sm:$0xf]
    %v59 = vld [vmem:[%s1 + $0x40] sm:$0xf]
    %v60 = vld [vmem:[%s1 + $0x44] sm:$0xf]
    %v61 = vld [vmem:[%s1 + $0x48] sm:$0xf]
    %v62 = vld [vmem:[%s1 + $0x4c] sm:$0xf]
    %v63 = vld [vmem:[%s1 + $0x50] sm:$0xf]
    %v64 = vld [vmem:[%s1 + $0x54] sm:$0xf]
    %v65 = vld [vmem:[%s1 + $0x58] sm:$0xf]
    %v66 = vld [vmem:[%s1 + $0x5c] sm:$0xf]
    %v67 = vld [vmem:[%s1 + $0x60] sm:$0xf]
    %v68 = vld [vmem:[%s1 + $0x64] sm:$0xf]
    %v69 = vld [vmem:[%s1 + $0x68] sm:$0xf]
    %v70 = vld [vmem:[%s1 + $0x6c] sm:$0xf]
    %v71 = vld [vmem:[%s1 + $0x70] sm:$0xf]
    %v72 = vld [vmem:[%s1 + $0x74] sm:$0xf]
    %v73 = vld [vmem:[%s1 + $0x78] sm:$0xf]
    %v74 = vld [vmem:[%s1 + $0x7c] sm:$0xf]
    %v75 = vld [vmem:[%s1 + $0x80] sm:$0xf]
    %v76 = vld [vmem:[%s1 + $0x84] sm:$0xf]
    %v77 = vld [vmem:[%s1 + $0x88] sm:$0xf]
    %v78 = vld [vmem:[%s1 + $0x8c] sm:$0xf]
    %v79 = vld [vmem:[%s1 + $0x90] sm:$0xf]
    %v80 = vld [vmem:[%s1 + $0x94] sm:$0xf]
    %v81 = vld [vmem:[%s1 + $0x98] sm:$0xf]
    %v82 = vld [vmem:[%s1 + $0x9c] sm:$0xf]
    %v83 = vld [vmem:[%s1 + $0xa0] sm:$0xf]
    %v84 = vld [vmem:[%s1 + $0xa4] sm:$0xf]
    %v85 = vld [vmem:[%s1 + $0xa8] sm:$0xf]
    %v86 = vld [vmem:[%s1 + $0xac] sm:$0xf]
    %v87 = vld [vmem:[%s1 + $0xb0] sm:$0xf]
    %v88 = vld [vmem:[%s1 + $0xb4] sm:$0xf]
    %v89 = vld [vmem:[%s1 + $0xb8] sm:$0xf]
    %v90 = vld [vmem:[%s1 + $0xbc] sm:$0xf]
    %v91 = vld [vmem:[%s1 + $0xc0] sm:$0xf]
    %v92 = vld [vmem:[%s1 + $0xc4] sm:$0xf]
    %v93 = vld [vmem:[%s1 + $0xc8] sm:$0xf]
    %v94 = vld [vmem:[%s1 + $0xcc] sm:$0xf]
    %v95 = vld [vmem:[%s1 + $0xd0] sm:$0xf]
    %v96 = vld [vmem:[%s1 + $0xd4] sm:$0xf]
    %v97 = vld [vmem:[%s1 + $0xd8] sm:$0xf]
    %v98 = vld [vmem:[%s1 + $0xdc] sm:$0xf]
    %v99 = vld [vmem:[%s1 + $0xe0] sm:$0xf]
    %v100 = vld [vmem:[%s1 + $0xe4] sm:$0xf]
    %v101 = vld [vmem:[%s1 + $0xe8] sm:$0xf]
    %v102 = vld [vmem:[%s1 + $0xec] sm:$0xf]
    %v103 = vld [vmem:[%s1 + $0xf0] sm:$0xf]
    %v104 = vld [vmem:[%s1 + $0xf4] sm:$0xf]
    %v105 = vld [vmem:[%s1 + $0xf8] sm:$0xf]
    %v106 = vld [vmem:[%s1 + $0xfc] sm:$0xf]
    %v107 = vld [vmem:[%s1 + $0x100] sm:$0x1]
    %v108 = vld [vmem:[%s2] sm:$0x1]
    %v110 = vlaneseq
    %v111 = vshrl.u32 %v110, 7
    %v112 = vsub.s32 0, %v111
    %v113 = vrot.slane %v108, %v112
    %v118 = vunpack.c.l.b16 %v40
    %v119 = vunpack.c.h.b16 %v40
    %v120 = vunpack.c.l.b16 %v41
    %v121 = vunpack.c.h.b16 %v41
    %v122 = vunpack.c.l.b16 %v42
    %v123 = vpack.c.b16 %v118, %v118
    %v124 = vpack.c.b16 %v119, %v119
    %v125 = vpack.c.b16 %v120, %v120
    %v126 = vpack.c.b16 %v121, %v121
    %v127 = vpack.c.b16 %v122, %v122
    %v197 = vunpack.c.l.b16 %v43
    %v198 = vunpack.c.l.b16 %v44
    %v199 = vunpack.c.l.b16 %v45
    %v200 = vunpack.c.l.b16 %v46
    %v201 = vunpack.c.l.b16 %v47
    %v202 = vunpack.c.l.b16 %v48
    %v203 = vunpack.c.l.b16 %v49
    %v204 = vunpack.c.l.b16 %v50
    %v205 = vunpack.c.l.b16 %v51
    %v206 = vunpack.c.l.b16 %v52
    %v207 = vunpack.c.l.b16 %v53
    %v208 = vunpack.c.l.b16 %v54
    %v209 = vunpack.c.l.b16 %v55
    %v210 = vunpack.c.l.b16 %v56
    %v211 = vunpack.c.l.b16 %v57
    %v212 = vunpack.c.l.b16 %v58
    %v213 = vunpack.c.l.b16 %v59
    %v214 = vunpack.c.l.b16 %v60
    %v215 = vunpack.c.l.b16 %v61
    %v216 = vunpack.c.l.b16 %v62
    %v217 = vunpack.c.l.b16 %v63
    %v218 = vunpack.c.l.b16 %v64
    %v219 = vunpack.c.l.b16 %v65
    %v220 = vunpack.c.l.b16 %v66
    %v221 = vunpack.c.l.b16 %v67
    %v222 = vunpack.c.l.b16 %v68
    %v223 = vunpack.c.l.b16 %v69
    %v224 = vunpack.c.l.b16 %v70
    %v225 = vunpack.c.l.b16 %v71
    %v226 = vunpack.c.l.b16 %v72
    %v227 = vunpack.c.l.b16 %v73
    %v228 = vunpack.c.l.b16 %v74
    %v229 = vunpack.c.l.b16 %v75
    %v230 = vunpack.c.l.b16 %v76
    %v231 = vunpack.c.l.b16 %v77
    %v232 = vunpack.c.l.b16 %v78
    %v233 = vunpack.c.l.b16 %v79
    %v234 = vunpack.c.l.b16 %v80
    %v235 = vunpack.c.l.b16 %v81
    %v236 = vunpack.c.l.b16 %v82
    %v237 = vunpack.c.l.b16 %v83
    %v238 = vunpack.c.l.b16 %v84
    %v239 = vunpack.c.l.b16 %v85
    %v240 = vunpack.c.l.b16 %v86
    %v241 = vunpack.c.l.b16 %v87
    %v242 = vunpack.c.l.b16 %v88
    %v243 = vunpack.c.l.b16 %v89
    %v244 = vunpack.c.l.b16 %v90
    %v245 = vunpack.c.l.b16 %v91
    %v246 = vunpack.c.l.b16 %v92
    %v247 = vunpack.c.l.b16 %v93
    %v248 = vunpack.c.l.b16 %v94
    %v249 = vunpack.c.l.b16 %v95
    %v250 = vunpack.c.l.b16 %v96
    %v251 = vunpack.c.l.b16 %v97
    %v252 = vunpack.c.l.b16 %v98
    %v253 = vunpack.c.l.b16 %v99
    %v254 = vunpack.c.l.b16 %v100
    %v255 = vunpack.c.l.b16 %v101
    %v256 = vunpack.c.l.b16 %v102
    %v257 = vunpack.c.l.b16 %v103
    %v258 = vunpack.c.l.b16 %v104
    %v259 = vunpack.c.l.b16 %v105
    %v260 = vunpack.c.l.b16 %v106
    %v261 = vunpack.c.l.b16 %v107
    %v262 = vpack.c.b16 %v198, %v197
    %v263 = vpack.c.b16 %v200, %v199
    %v264 = vpack.c.b16 %v202, %v201
    %v265 = vpack.c.b16 %v204, %v203
    %v266 = vpack.c.b16 %v206, %v205
    %v267 = vpack.c.b16 %v208, %v207
    %v268 = vpack.c.b16 %v210, %v209
    %v269 = vpack.c.b16 %v212, %v211
    %v270 = vpack.c.b16 %v214, %v213
    %v271 = vpack.c.b16 %v216, %v215
    %v272 = vpack.c.b16 %v218, %v217
    %v273 = vpack.c.b16 %v220, %v219
    %v274 = vpack.c.b16 %v222, %v221
    %v275 = vpack.c.b16 %v224, %v223
    %v276 = vpack.c.b16 %v226, %v225
    %v277 = vpack.c.b16 %v228, %v227
    %v278 = vpack.c.b16 %v230, %v229
    %v279 = vpack.c.b16 %v232, %v231
    %v280 = vpack.c.b16 %v234, %v233
    %v281 = vpack.c.b16 %v236, %v235
    %v282 = vpack.c.b16 %v238, %v237
    %v283 = vpack.c.b16 %v240, %v239
    %v284 = vpack.c.b16 %v242, %v241
    %v285 = vpack.c.b16 %v244, %v243
    %v286 = vpack.c.b16 %v246, %v245
    %v287 = vpack.c.b16 %v248, %v247
    %v288 = vpack.c.b16 %v250, %v249
    %v289 = vpack.c.b16 %v252, %v251
    %v290 = vpack.c.b16 %v254, %v253
    %v291 = vpack.c.b16 %v256, %v255
    %v292 = vpack.c.b16 %v258, %v257
    %v293 = vpack.c.b16 %v260, %v259
    %v294 = vpack.c.b16 %v261, %v261
    %vm327 = vcmask 7168
    %v329 = vsel %vm327, %v127, 0
    %vm331 = vcmask 1040384
    %v332 = vsel 0, 4294967295, 65535
    %v333 = vsel %vm331, %v332, 0
    %v335 = vand.u32 %v294, %v333
    %337 = vmatprep.subr.bf16.mxu0 0
    %338 = vmatpush1.bf16.msra.mxu0 %v269
    %339 = vmatprep.subr.bf16.mxu0 0
    %340 = vmatpush1.bf16.msra.mxu0 %v268
    %341 = vmatprep.subr.bf16.mxu0 0
    %342 = vmatpush1.bf16.msra.mxu0 %v267
    %343 = vmatprep.subr.bf16.mxu0 0
    %344 = vmatpush1.bf16.msra.mxu0 %v266
    %345 = vmatprep.subr.bf16.mxu0 0
    %346 = vmatpush1.bf16.msra.mxu0 %v265
    %347 = vmatprep.subr.bf16.mxu0 0
    %348 = vmatpush1.bf16.msra.mxu0 %v264
    %349 = vmatprep.subr.bf16.mxu0 0
    %350 = vmatpush1.bf16.msra.mxu0 %v263
    %351 = vmatprep.subr.bf16.mxu0 0
    %352 = vmatpush1.bf16.msra.mxu0 %v262
    %353 = vmatprep.subr.bf16.mxu0 0
    %354 = vmatpush2.bf16.msra.mxu0 %v277
    %355 = vmatprep.subr.bf16.mxu0 0
    %356 = vmatpush2.bf16.msra.mxu0 %v276
    %357 = vmatprep.subr.bf16.mxu0 0
    %358 = vmatpush2.bf16.msra.mxu0 %v275
    %359 = vmatprep.subr.bf16.mxu0 0
    %360 = vmatpush2.bf16.msra.mxu0 %v274
    %361 = vmatprep.subr.bf16.mxu0 0
    %362 = vmatpush2.bf16.msra.mxu0 %v273
    %363 = vmatprep.subr.bf16.mxu0 0
    %364 = vmatpush2.bf16.msra.mxu0 %v272
    %365 = vmatprep.subr.bf16.mxu0 0
    %366 = vmatpush2.bf16.msra.mxu0 %v271
    %367 = vmatprep.subr.bf16.mxu0 0
    %368 = vmatpush2.bf16.msra.mxu0 %v270
    %369 = vmatprep.mubr.bf16.mxu0 %v124
    %370 = vmatmul.mubr.bf16.gmra.mxu0 %v123
    %v371 = vpop.f32.mrf.mxu0
    %v372 = vadd.f32 %v113, %v371
    %v373 = vpop.f32.mrf.mxu0
    %v374 = vpop.f32.mrf.mxu0
    %v375 = vpop.f32.mrf.mxu0
    %376 = vdwg.mxu0
    %377 = vmatprep.subr.bf16.mxu0 0
    %378 = vmatpush1.bf16.msra.mxu0 %v285
    %379 = vmatprep.subr.bf16.mxu0 0
    %380 = vmatpush1.bf16.msra.mxu0 %v284
    %381 = vmatprep.subr.bf16.mxu0 0
    %382 = vmatpush1.bf16.msra.mxu0 %v283
    %383 = vmatprep.subr.bf16.mxu0 0
    %384 = vmatpush1.bf16.msra.mxu0 %v282
    %385 = vmatprep.subr.bf16.mxu0 0
    %386 = vmatpush1.bf16.msra.mxu0 %v281
    %387 = vmatprep.subr.bf16.mxu0 0
    %388 = vmatpush1.bf16.msra.mxu0 %v280
    %389 = vmatprep.subr.bf16.mxu0 0
    %390 = vmatpush1.bf16.msra.mxu0 %v279
    %391 = vmatprep.subr.bf16.mxu0 0
    %392 = vmatpush1.bf16.msra.mxu0 %v278
    %393 = vmatprep.subr.bf16.mxu0 0
    %394 = vmatpush2.bf16.msra.mxu0 %v293
    %395 = vmatprep.subr.bf16.mxu0 0
    %396 = vmatpush2.bf16.msra.mxu0 %v292
    %397 = vmatprep.subr.bf16.mxu0 0
    %398 = vmatpush2.bf16.msra.mxu0 %v291
    %399 = vmatprep.subr.bf16.mxu0 0
    %400 = vmatpush2.bf16.msra.mxu0 %v290
    %401 = vmatprep.subr.bf16.mxu0 0
    %402 = vmatpush2.bf16.msra.mxu0 %v289
    %403 = vmatprep.subr.bf16.mxu0 0
    %404 = vmatpush2.bf16.msra.mxu0 %v288
    %405 = vmatprep.subr.bf16.mxu0 0
    %406 = vmatpush2.bf16.msra.mxu0 %v287
    %407 = vmatprep.subr.bf16.mxu0 0
    %408 = vmatpush2.bf16.msra.mxu0 %v286
    %409 = vmatprep.mubr.bf16.mxu0 %v126
    %410 = vmatmul.mubr.bf16.gmra.mxu0 %v125
    %v411 = vpop.f32.mrf.mxu0
    %v412 = vadd.f32 %v372, %v411
    %v413 = vpop.f32.mrf.mxu0
    %v414 = vpop.f32.mrf.mxu0
    %v415 = vpop.f32.mrf.mxu0
    %416 = vdwg.mxu0
    %417 = vmatprep.subr.bf16.mxu0 0
    %418 = vmatpush1.bf16.msra.mxu0 0
    %419 = vmatprep.subr.bf16.mxu0 0
    %420 = vmatpush1.bf16.msra.mxu0 0
    %421 = vmatprep.subr.bf16.mxu0 0
    %422 = vmatpush1.bf16.msra.mxu0 0
    %423 = vmatprep.subr.bf16.mxu0 0
    %424 = vmatpush1.bf16.msra.mxu0 0
    %425 = vmatprep.subr.bf16.mxu0 0
    %426 = vmatpush1.bf16.msra.mxu0 0
    %427 = vmatprep.subr.bf16.mxu0 0
    %428 = vmatpush1.bf16.msra.mxu0 0
    %429 = vmatprep.subr.bf16.mxu0 0
    %430 = vmatpush1.bf16.msra.mxu0 0
    %431 = vmatprep.subr.bf16.mxu0 0
    %432 = vmatpush1.bf16.msra.mxu0 %v335
    %433 = vmatprep.subr.bf16.mxu0 0
    %434 = vmatpush2.bf16.msra.mxu0 0
    %435 = vmatprep.subr.bf16.mxu0 0
    %436 = vmatpush2.bf16.msra.mxu0 0
    %437 = vmatprep.subr.bf16.mxu0 0
    %438 = vmatpush2.bf16.msra.mxu0 0
    %439 = vmatprep.subr.bf16.mxu0 0
    %440 = vmatpush2.bf16.msra.mxu0 0
    %441 = vmatprep.subr.bf16.mxu0 0
    %442 = vmatpush2.bf16.msra.mxu0 0
    %443 = vmatprep.subr.bf16.mxu0 0
    %444 = vmatpush2.bf16.msra.mxu0 0
    %445 = vmatprep.subr.bf16.mxu0 0
    %446 = vmatpush2.bf16.msra.mxu0 0
    %447 = vmatprep.subr.bf16.mxu0 0
    %448 = vmatpush2.bf16.msra.mxu0 0
    %449 = vmatprep.mubr.bf16.mxu0 0
    %450 = vmatmul.mubr.bf16.gmra.mxu0 %v329
    %v451 = vpop.f32.mrf.mxu0
    %v452 = vadd.f32 %v412, %v451
    %v453 = vpop.f32.mrf.mxu0
    %v454 = vpop.f32.mrf.mxu0
    %v455 = vpop.f32.mrf.mxu0
    %456 = vdwg.mxu0
    %v457 = vtanh.pop %v452
    %v458 = vpack.c.bf16 %v457, %v457
    %v459 = vld [vmem:[%s3] sm:$0xf]
    %v460 = vld [vmem:[%s3 + $0x4] sm:$0xf]
    %v461 = vld [vmem:[%s3 + $0x8] sm:$0xf]
    %v462 = vld [vmem:[%s3 + $0xc] sm:$0xf]
    %v463 = vld [vmem:[%s3 + $0x10] sm:$0xf]
    %v464 = vld [vmem:[%s3 + $0x14] sm:$0xf]
    %v465 = vld [vmem:[%s3 + $0x18] sm:$0xf]
    %v466 = vld [vmem:[%s3 + $0x1c] sm:$0xf]
    %v467 = vld [vmem:[%s3 + $0x20] sm:$0xf]
    %v468 = vld [vmem:[%s3 + $0x24] sm:$0xf]
    %v469 = vld [vmem:[%s3 + $0x28] sm:$0xf]
    %v470 = vld [vmem:[%s3 + $0x2c] sm:$0xf]
    %v471 = vld [vmem:[%s3 + $0x30] sm:$0xf]
    %v472 = vld [vmem:[%s3 + $0x34] sm:$0xf]
    %v473 = vld [vmem:[%s3 + $0x38] sm:$0xf]
    %v474 = vld [vmem:[%s3 + $0x3c] sm:$0xf]
    %v475 = vld [vmem:[%s4] sm:$0x1]
    %v477 = vlaneseq
    %v478 = vshrl.u32 %v477, 7
    %v479 = vsub.s32 0, %v478
    %v480 = vrot.slane %v475, %v479
    %v498 = vunpack.c.l.b16 %v459
    %v499 = vunpack.c.l.b16 %v460
    %v500 = vunpack.c.l.b16 %v461
    %v501 = vunpack.c.l.b16 %v462
    %v502 = vunpack.c.l.b16 %v463
    %v503 = vunpack.c.l.b16 %v464
    %v504 = vunpack.c.l.b16 %v465
    %v505 = vunpack.c.l.b16 %v466
    %v506 = vunpack.c.l.b16 %v467
    %v507 = vunpack.c.l.b16 %v468
    %v508 = vunpack.c.l.b16 %v469
    %v509 = vunpack.c.l.b16 %v470
    %v510 = vunpack.c.l.b16 %v471
    %v511 = vunpack.c.l.b16 %v472
    %v512 = vunpack.c.l.b16 %v473
    %v513 = vunpack.c.l.b16 %v474
    %v514 = vpack.c.b16 %v499, %v498
    %v515 = vpack.c.b16 %v501, %v500
    %v516 = vpack.c.b16 %v503, %v502
    %v517 = vpack.c.b16 %v505, %v504
    %v518 = vpack.c.b16 %v507, %v506
    %v519 = vpack.c.b16 %v509, %v508
    %v520 = vpack.c.b16 %v511, %v510
    %v521 = vpack.c.b16 %v513, %v512
    %530 = vmatprep.subr.bf16.mxu0 0
    %531 = vmatpush1.bf16.msra.mxu0 %v521
    %532 = vmatprep.subr.bf16.mxu0 0
    %533 = vmatpush1.bf16.msra.mxu0 %v520
    %534 = vmatprep.subr.bf16.mxu0 0
    %535 = vmatpush1.bf16.msra.mxu0 %v519
    %536 = vmatprep.subr.bf16.mxu0 0
    %537 = vmatpush1.bf16.msra.mxu0 %v518
    %538 = vmatprep.subr.bf16.mxu0 0
    %539 = vmatpush1.bf16.msra.mxu0 %v517
    %540 = vmatprep.subr.bf16.mxu0 0
    %541 = vmatpush1.bf16.msra.mxu0 %v516
    %542 = vmatprep.subr.bf16.mxu0 0
    %543 = vmatpush1.bf16.msra.mxu0 %v515
    %544 = vmatprep.subr.bf16.mxu0 0
    %545 = vmatpush1.bf16.msra.mxu0 %v514
    %546 = vmatprep.subr.bf16.mxu0 0
    %547 = vmatpush2.bf16.msra.mxu0 0
    %548 = vmatprep.subr.bf16.mxu0 0
    %549 = vmatpush2.bf16.msra.mxu0 0
    %550 = vmatprep.subr.bf16.mxu0 0
    %551 = vmatpush2.bf16.msra.mxu0 0
    %552 = vmatprep.subr.bf16.mxu0 0
    %553 = vmatpush2.bf16.msra.mxu0 0
    %554 = vmatprep.subr.bf16.mxu0 0
    %555 = vmatpush2.bf16.msra.mxu0 0
    %556 = vmatprep.subr.bf16.mxu0 0
    %557 = vmatpush2.bf16.msra.mxu0 0
    %558 = vmatprep.subr.bf16.mxu0 0
    %559 = vmatpush2.bf16.msra.mxu0 0
    %560 = vmatprep.subr.bf16.mxu0 0
    %561 = vmatpush2.bf16.msra.mxu0 0
    %562 = vmatprep.mubr.bf16.mxu0 0
    %563 = vmatmul.mubr.bf16.gmra.mxu0 %v458
    %v564 = vpop.f32.mrf.mxu0
    %v565 = vadd.f32 %v480, %v564
    %v566 = vpop.f32.mrf.mxu0
    %v567 = vpop.f32.mrf.mxu0
    %v568 = vpop.f32.mrf.mxu0
    %569 = vdwg.mxu0
    %v570 = vmul.f32 %v565, 0.5
    %v571 = vmul.f32 %v570, 1.442695
    %v572 = vpow.pop %v571
    %v573 = vld [vmem:[%s5] sm:$0xff]
    %575 = vrot.lane.b32.xlu0 %v573, 16
    %v576 = vpop.permute.xlu0 %575
    %v578 = vmul.f32 %v572, %v576
    %580 = vrot.lane.b32.xlu0 %v578, 112
    %v581 = vpop.permute.xlu0 %580
    %v583 = vadd.f32 %v565, %v581
    %v584 = vpack.c.bf16 %v583, %v583
    %v585 = vld [vmem:[%s6] sm:$0xf]
    %v586 = vld [vmem:[%s6 + $0x4] sm:$0xf]
    %v587 = vld [vmem:[%s7] sm:$0x1]
    %v589 = vlaneseq
    %v590 = vshrl.u32 %v589, 7
    %v591 = vsub.s32 0, %v590
    %v592 = vrot.slane %v587, %v591
    %v596 = vunpack.c.l.b16 %v585
    %v597 = vunpack.c.l.b16 %v586
    %v598 = vpack.c.b16 %v597, %v596
    %vm600 = vcmask 130048
    %v602 = vsel %vm600, %v584, 0
    %604 = vmatprep.subr.bf16.mxu0 0
    %605 = vmatpush1.bf16.msra.mxu0 0
    %606 = vmatprep.subr.bf16.mxu0 0
    %607 = vmatpush1.bf16.msra.mxu0 0
    %608 = vmatprep.subr.bf16.mxu0 0
    %609 = vmatpush1.bf16.msra.mxu0 0
    %610 = vmatprep.subr.bf16.mxu0 0
    %611 = vmatpush1.bf16.msra.mxu0 0
    %612 = vmatprep.subr.bf16.mxu0 0
    %613 = vmatpush1.bf16.msra.mxu0 0
    %614 = vmatprep.subr.bf16.mxu0 0
    %615 = vmatpush1.bf16.msra.mxu0 0
    %616 = vmatprep.subr.bf16.mxu0 0
    %617 = vmatpush1.bf16.msra.mxu0 0
    %618 = vmatprep.subr.bf16.mxu0 0
    %619 = vmatpush1.bf16.msra.mxu0 %v598
    %620 = vmatprep.subr.bf16.mxu0 0
    %621 = vmatpush2.bf16.msra.mxu0 0
    %622 = vmatprep.subr.bf16.mxu0 0
    %623 = vmatpush2.bf16.msra.mxu0 0
    %624 = vmatprep.subr.bf16.mxu0 0
    %625 = vmatpush2.bf16.msra.mxu0 0
    %626 = vmatprep.subr.bf16.mxu0 0
    %627 = vmatpush2.bf16.msra.mxu0 0
    %628 = vmatprep.subr.bf16.mxu0 0
    %629 = vmatpush2.bf16.msra.mxu0 0
    %630 = vmatprep.subr.bf16.mxu0 0
    %631 = vmatpush2.bf16.msra.mxu0 0
    %632 = vmatprep.subr.bf16.mxu0 0
    %633 = vmatpush2.bf16.msra.mxu0 0
    %634 = vmatprep.subr.bf16.mxu0 0
    %635 = vmatpush2.bf16.msra.mxu0 0
    %636 = vmatprep.mubr.bf16.mxu0 0
    %637 = vmatmul.mubr.bf16.gmra.mxu0 %v602
    %v638 = vpop.f32.mrf.mxu0
    %v639 = vadd.f32 %v592, %v638
    %v640 = vpop.f32.mrf.mxu0
    %v641 = vpop.f32.mrf.mxu0
    %v642 = vpop.f32.mrf.mxu0
    %643 = vdwg.mxu0
    %v644 = vtanh.pop %v639
    %v645 = vpack.c.bf16 %v644, %v644
    %v646 = vld [vmem:[%s8] sm:$0xff]
    %v647 = vld [vmem:[%s8 + $0x8] sm:$0xff]
    %v648 = vld [vmem:[%s8 + $0x10] sm:$0xf]
    %v649 = vld [vmem:[%s8 + $0x14] sm:$0xff]
    %v650 = vld [vmem:[%s8 + $0x1c] sm:$0xff]
    %v651 = vld [vmem:[%s8 + $0x24] sm:$0xf]
    %v652 = vld [vmem:[%s8 + $0x28] sm:$0xff]
    %v653 = vld [vmem:[%s8 + $0x30] sm:$0xff]
    %v654 = vld [vmem:[%s8 + $0x38] sm:$0xf]
    %v655 = vld [vmem:[%s8 + $0x3c] sm:$0xff]
    %v656 = vld [vmem:[%s8 + $0x44] sm:$0xff]
    %v657 = vld [vmem:[%s8 + $0x4c] sm:$0xf]
    %v658 = vld [vmem:[%s8 + $0x50] sm:$0xff]
    %v659 = vld [vmem:[%s8 + $0x58] sm:$0xff]
    %v660 = vld [vmem:[%s8 + $0x60] sm:$0xf]
    %v661 = vld [vmem:[%s8 + $0x64] sm:$0xff]
    %v662 = vld [vmem:[%s8 + $0x6c] sm:$0xff]
    %v663 = vld [vmem:[%s8 + $0x74] sm:$0xf]
    %v664 = vld [vmem:[%s8 + $0x78] sm:$0xff]
    %v665 = vld [vmem:[%s8 + $0x80] sm:$0xff]
    %v666 = vld [vmem:[%s8 + $0x88] sm:$0xf]
    %v667 = vld [vmem:[%s8 + $0x8c] sm:$0xff]
    %v668 = vld [vmem:[%s8 + $0x94] sm:$0xff]
    %v669 = vld [vmem:[%s8 + $0x9c] sm:$0xf]
    %v670 = vld [vmem:[%s8 + $0xa0] sm:$0xff]
    %v671 = vld [vmem:[%s8 + $0xa8] sm:$0xff]
    %v672 = vld [vmem:[%s8 + $0xb0] sm:$0xf]
    %v673 = vld [vmem:[%s8 + $0xb4] sm:$0xff]
    %v674 = vld [vmem:[%s8 + $0xbc] sm:$0xff]
    %v675 = vld [vmem:[%s8 + $0xc4] sm:$0xf]
    %v676 = vld [vmem:[%s8 + $0xc8] sm:$0xff]
    %v677 = vld [vmem:[%s8 + $0xd0] sm:$0xff]
    %v678 = vld [vmem:[%s8 + $0xd8] sm:$0xf]
    %v679 = vld [vmem:[%s8 + $0xdc] sm:$0xff]
    %v680 = vld [vmem:[%s8 + $0xe4] sm:$0xff]
    %v681 = vld [vmem:[%s8 + $0xec] sm:$0xf]
    %v682 = vld [vmem:[%s8 + $0xf0] sm:$0xff]
    %v683 = vld [vmem:[%s8 + $0xf8] sm:$0xff]
    %v684 = vld [vmem:[%s8 + $0x100] sm:$0xf]
    %v685 = vld [vmem:[%s8 + $0x104] sm:$0xff]
    %v686 = vld [vmem:[%s8 + $0x10c] sm:$0xff]
    %v687 = vld [vmem:[%s8 + $0x114] sm:$0xf]
    %v688 = vld [vmem:[%s8 + $0x118] sm:$0xff]
    %v689 = vld [vmem:[%s8 + $0x120] sm:$0xff]
    %v690 = vld [vmem:[%s8 + $0x128] sm:$0xf]
    %v691 = vld [vmem:[%s8 + $0x12c] sm:$0xff]
    %v692 = vld [vmem:[%s8 + $0x134] sm:$0xff]
    %v693 = vld [vmem:[%s8 + $0x13c] sm:$0xf]
    %v694 = vld [vmem:[%s9] sm:$0x1f]
    %v696 = vlaneseq
    %v697 = vshrl.u32 %v696, 7
    %v698 = vsub.s32 0, %v697
    %v699 = vrot.slane %v694, %v698
    %v700 = vlaneseq
    %v701 = vshrl.u32 %v700, 7
    %v702 = vsub.s32 1, %v701
    %v703 = vrot.slane %v694, %v702
    %v704 = vlaneseq
    %v705 = vshrl.u32 %v704, 7
    %v706 = vsub.s32 2, %v705
    %v707 = vrot.slane %v694, %v706
    %v708 = vlaneseq
    %v709 = vshrl.u32 %v708, 7
    %v710 = vsub.s32 3, %v709
    %v711 = vrot.slane %v694, %v710
    %v712 = vlaneseq
    %v713 = vshrl.u32 %v712, 7
    %v714 = vsub.s32 4, %v713
    %v715 = vrot.slane %v694, %v714
    %v769 = vunpack.c.l.b16 %v646
    %v770 = vunpack.c.h.b16 %v646
    %v771 = vunpack.c.l.b16 %v647
    %v772 = vunpack.c.h.b16 %v647
    %v773 = vunpack.c.l.b16 %v648
    %v774 = vunpack.c.l.b16 %v649
    %v775 = vunpack.c.h.b16 %v649
    %v776 = vunpack.c.l.b16 %v650
    %v777 = vunpack.c.h.b16 %v650
    %v778 = vunpack.c.l.b16 %v651
    %v779 = vunpack.c.l.b16 %v652
    %v780 = vunpack.c.h.b16 %v652
    %v781 = vunpack.c.l.b16 %v653
    %v782 = vunpack.c.h.b16 %v653
    %v783 = vunpack.c.l.b16 %v654
    %v784 = vunpack.c.l.b16 %v655
    %v785 = vunpack.c.h.b16 %v655
    %v786 = vunpack.c.l.b16 %v656
    %v787 = vunpack.c.h.b16 %v656
    %v788 = vunpack.c.l.b16 %v657
    %v789 = vunpack.c.l.b16 %v658
    %v790 = vunpack.c.h.b16 %v658
    %v791 = vunpack.c.l.b16 %v659
    %v792 = vunpack.c.h.b16 %v659
    %v793 = vunpack.c.l.b16 %v660
    %v794 = vunpack.c.l.b16 %v661
    %v795 = vunpack.c.h.b16 %v661
    %v796 = vunpack.c.l.b16 %v662
    %v797 = vunpack.c.h.b16 %v662
    %v798 = vunpack.c.l.b16 %v663
    %v799 = vunpack.c.l.b16 %v664
    %v800 = vunpack.c.h.b16 %v664
    %v801 = vunpack.c.l.b16 %v665
    %v802 = vunpack.c.h.b16 %v665
    %v803 = vunpack.c.l.b16 %v666
    %v804 = vunpack.c.l.b16 %v667
    %v805 = vunpack.c.h.b16 %v667
    %v806 = vunpack.c.l.b16 %v668
    %v807 = vunpack.c.h.b16 %v668
    %v808 = vunpack.c.l.b16 %v669
    %v809 = vunpack.c.l.b16 %v670
    %v810 = vunpack.c.h.b16 %v670
    %v811 = vunpack.c.l.b16 %v671
    %v812 = vunpack.c.h.b16 %v671
    %v813 = vunpack.c.l.b16 %v672
    %v814 = vunpack.c.l.b16 %v673
    %v815 = vunpack.c.h.b16 %v673
    %v816 = vunpack.c.l.b16 %v674
    %v817 = vunpack.c.h.b16 %v674
    %v818 = vunpack.c.l.b16 %v675
    %v819 = vunpack.c.l.b16 %v676
    %v820 = vunpack.c.h.b16 %v676
    %v821 = vunpack.c.l.b16 %v677
    %v822 = vunpack.c.h.b16 %v677
    %v823 = vunpack.c.l.b16 %v678
    %v824 = vunpack.c.l.b16 %v679
    %v825 = vunpack.c.h.b16 %v679
    %v826 = vunpack.c.l.b16 %v680
    %v827 = vunpack.c.h.b16 %v680
    %v828 = vunpack.c.l.b16 %v681
    %v829 = vunpack.c.l.b16 %v682
    %v830 = vunpack.c.h.b16 %v682
    %v831 = vunpack.c.l.b16 %v683
    %v832 = vunpack.c.h.b16 %v683
    %v833 = vunpack.c.l.b16 %v684
    %v834 = vunpack.c.l.b16 %v685
    %v835 = vunpack.c.h.b16 %v685
    %v836 = vunpack.c.l.b16 %v686
    %v837 = vunpack.c.h.b16 %v686
    %v838 = vunpack.c.l.b16 %v687
    %v839 = vunpack.c.l.b16 %v688
    %v840 = vunpack.c.h.b16 %v688
    %v841 = vunpack.c.l.b16 %v689
    %v842 = vunpack.c.h.b16 %v689
    %v843 = vunpack.c.l.b16 %v690
    %v844 = vunpack.c.l.b16 %v691
    %v845 = vunpack.c.h.b16 %v691
    %v846 = vunpack.c.l.b16 %v692
    %v847 = vunpack.c.h.b16 %v692
    %v848 = vunpack.c.l.b16 %v693
    %v849 = vpack.c.b16 %v774, %v769
    %v850 = vpack.c.b16 %v775, %v770
    %v851 = vpack.c.b16 %v776, %v771
    %v852 = vpack.c.b16 %v777, %v772
    %v853 = vpack.c.b16 %v778, %v773
    %v854 = vpack.c.b16 %v784, %v779
    %v855 = vpack.c.b16 %v785, %v780
    %v856 = vpack.c.b16 %v786, %v781
    %v857 = vpack.c.b16 %v787, %v782
    %v858 = vpack.c.b16 %v788, %v783
    %v859 = vpack.c.b16 %v794, %v789
    %v860 = vpack.c.b16 %v795, %v790
    %v861 = vpack.c.b16 %v796, %v791
    %v862 = vpack.c.b16 %v797, %v792
    %v863 = vpack.c.b16 %v798, %v793
    %v864 = vpack.c.b16 %v804, %v799
    %v865 = vpack.c.b16 %v805, %v800
    %v866 = vpack.c.b16 %v806, %v801
    %v867 = vpack.c.b16 %v807, %v802
    %v868 = vpack.c.b16 %v808, %v803
    %v869 = vpack.c.b16 %v814, %v809
    %v870 = vpack.c.b16 %v815, %v810
    %v871 = vpack.c.b16 %v816, %v811
    %v872 = vpack.c.b16 %v817, %v812
    %v873 = vpack.c.b16 %v818, %v813
    %v874 = vpack.c.b16 %v824, %v819
    %v875 = vpack.c.b16 %v825, %v820
    %v876 = vpack.c.b16 %v826, %v821
    %v877 = vpack.c.b16 %v827, %v822
    %v878 = vpack.c.b16 %v828, %v823
    %v879 = vpack.c.b16 %v834, %v829
    %v880 = vpack.c.b16 %v835, %v830
    %v881 = vpack.c.b16 %v836, %v831
    %v882 = vpack.c.b16 %v837, %v832
    %v883 = vpack.c.b16 %v838, %v833
    %v884 = vpack.c.b16 %v844, %v839
    %v885 = vpack.c.b16 %v845, %v840
    %v886 = vpack.c.b16 %v846, %v841
    %v887 = vpack.c.b16 %v847, %v842
    %v888 = vpack.c.b16 %v848, %v843
    %929 = vmatprep.subr.bf16.mxu0 %v885
    %930 = vmatpush1.bf16.msra.mxu0 %v884
    %931 = vmatprep.subr.bf16.mxu0 %v880
    %932 = vmatpush1.bf16.msra.mxu0 %v879
    %933 = vmatprep.subr.bf16.mxu0 %v875
    %934 = vmatpush1.bf16.msra.mxu0 %v874
    %935 = vmatprep.subr.bf16.mxu0 %v870
    %936 = vmatpush1.bf16.msra.mxu0 %v869
    %937 = vmatprep.subr.bf16.mxu0 %v865
    %938 = vmatpush1.bf16.msra.mxu0 %v864
    %939 = vmatprep.subr.bf16.mxu0 %v860
    %940 = vmatpush1.bf16.msra.mxu0 %v859
    %941 = vmatprep.subr.bf16.mxu0 %v855
    %942 = vmatpush1.bf16.msra.mxu0 %v854
    %943 = vmatprep.subr.bf16.mxu0 %v850
    %944 = vmatpush1.bf16.msra.mxu0 %v849
    %945 = vmatprep.subr.bf16.mxu0 0
    %946 = vmatpush2.bf16.msra.mxu0 0
    %947 = vmatprep.subr.bf16.mxu0 0
    %948 = vmatpush2.bf16.msra.mxu0 0
    %949 = vmatprep.subr.bf16.mxu0 0
    %950 = vmatpush2.bf16.msra.mxu0 0
    %951 = vmatprep.subr.bf16.mxu0 0
    %952 = vmatpush2.bf16.msra.mxu0 0
    %953 = vmatprep.subr.bf16.mxu0 0
    %954 = vmatpush2.bf16.msra.mxu0 0
    %955 = vmatprep.subr.bf16.mxu0 0
    %956 = vmatpush2.bf16.msra.mxu0 0
    %957 = vmatprep.subr.bf16.mxu0 0
    %958 = vmatpush2.bf16.msra.mxu0 0
    %959 = vmatprep.subr.bf16.mxu0 0
    %960 = vmatpush2.bf16.msra.mxu0 0
    %961 = vmatprep.mubr.bf16.mxu0 0
    %962 = vmatmul.mubr.bf16.gmra.mxu0 %v645
    %v963 = vpop.f32.mrf.mxu0
    %v964 = vadd.f32 %v699, %v963
    %v965 = vpop.f32.mrf.mxu0
    %v966 = vadd.f32 %v703, %v965
    %v967 = vpop.f32.mrf.mxu0
    %v968 = vpop.f32.mrf.mxu0
    %969 = vdwg.mxu0
    %970 = vmatprep.subr.bf16.mxu0 %v887
    %971 = vmatpush1.bf16.msra.mxu0 %v886
    %972 = vmatprep.subr.bf16.mxu0 %v882
    %973 = vmatpush1.bf16.msra.mxu0 %v881
    %974 = vmatprep.subr.bf16.mxu0 %v877
    %975 = vmatpush1.bf16.msra.mxu0 %v876
    %976 = vmatprep.subr.bf16.mxu0 %v872
    %977 = vmatpush1.bf16.msra.mxu0 %v871
    %978 = vmatprep.subr.bf16.mxu0 %v867
    %979 = vmatpush1.bf16.msra.mxu0 %v866
    %980 = vmatprep.subr.bf16.mxu0 %v862
    %981 = vmatpush1.bf16.msra.mxu0 %v861
    %982 = vmatprep.subr.bf16.mxu0 %v857
    %983 = vmatpush1.bf16.msra.mxu0 %v856
    %984 = vmatprep.subr.bf16.mxu0 %v852
    %985 = vmatpush1.bf16.msra.mxu0 %v851
    %986 = vmatprep.subr.bf16.mxu0 0
    %987 = vmatpush2.bf16.msra.mxu0 0
    %988 = vmatprep.subr.bf16.mxu0 0
    %989 = vmatpush2.bf16.msra.mxu0 0
    %990 = vmatprep.subr.bf16.mxu0 0
    %991 = vmatpush2.bf16.msra.mxu0 0
    %992 = vmatprep.subr.bf16.mxu0 0
    %993 = vmatpush2.bf16.msra.mxu0 0
    %994 = vmatprep.subr.bf16.mxu0 0
    %995 = vmatpush2.bf16.msra.mxu0 0
    %996 = vmatprep.subr.bf16.mxu0 0
    %997 = vmatpush2.bf16.msra.mxu0 0
    %998 = vmatprep.subr.bf16.mxu0 0
    %999 = vmatpush2.bf16.msra.mxu0 0
    %1000 = vmatprep.subr.bf16.mxu0 0
    %1001 = vmatpush2.bf16.msra.mxu0 0
    %1002 = vmatprep.mubr.bf16.mxu0 0
    %1003 = vmatmul.mubr.bf16.gmra.mxu0 %v645
    %v1004 = vpop.f32.mrf.mxu0
    %v1005 = vadd.f32 %v707, %v1004
    %v1006 = vpop.f32.mrf.mxu0
    %v1007 = vadd.f32 %v711, %v1006
    %v1008 = vpop.f32.mrf.mxu0
    %v1009 = vpop.f32.mrf.mxu0
    %1010 = vdwg.mxu0
    %1011 = vmatprep.subr.bf16.mxu0 0
    %1012 = vmatpush1.bf16.msra.mxu0 %v888
    %1013 = vmatprep.subr.bf16.mxu0 0
    %1014 = vmatpush1.bf16.msra.mxu0 %v883
    %1015 = vmatprep.subr.bf16.mxu0 0
    %1016 = vmatpush1.bf16.msra.mxu0 %v878
    %1017 = vmatprep.subr.bf16.mxu0 0
    %1018 = vmatpush1.bf16.msra.mxu0 %v873
    %1019 = vmatprep.subr.bf16.mxu0 0
    %1020 = vmatpush1.bf16.msra.mxu0 %v868
    %1021 = vmatprep.subr.bf16.mxu0 0
    %1022 = vmatpush1.bf16.msra.mxu0 %v863
    %1023 = vmatprep.subr.bf16.mxu0 0
    %1024 = vmatpush1.bf16.msra.mxu0 %v858
    %1025 = vmatprep.subr.bf16.mxu0 0
    %1026 = vmatpush1.bf16.msra.mxu0 %v853
    %1027 = vmatprep.subr.bf16.mxu0 0
    %1028 = vmatpush2.bf16.msra.mxu0 0
    %1029 = vmatprep.subr.bf16.mxu0 0
    %1030 = vmatpush2.bf16.msra.mxu0 0
    %1031 = vmatprep.subr.bf16.mxu0 0
    %1032 = vmatpush2.bf16.msra.mxu0 0
    %1033 = vmatprep.subr.bf16.mxu0 0
    %1034 = vmatpush2.bf16.msra.mxu0 0
    %1035 = vmatprep.subr.bf16.mxu0 0
    %1036 = vmatpush2.bf16.msra.mxu0 0
    %1037 = vmatprep.subr.bf16.mxu0 0
    %1038 = vmatpush2.bf16.msra.mxu0 0
    %1039 = vmatprep.subr.bf16.mxu0 0
    %1040 = vmatpush2.bf16.msra.mxu0 0
    %1041 = vmatprep.subr.bf16.mxu0 0
    %1042 = vmatpush2.bf16.msra.mxu0 0
    %1043 = vmatprep.mubr.bf16.mxu0 0
    %1044 = vmatmul.mubr.bf16.gmra.mxu0 %v645
    %v1045 = vpop.f32.mrf.mxu0
    %v1046 = vadd.f32 %v715, %v1045
    %v1047 = vpop.f32.mrf.mxu0
    %v1048 = vpop.f32.mrf.mxu0
    %v1049 = vpop.f32.mrf.mxu0
    %1050 = vdwg.mxu0
    %v1051 = vpack.c.bf16 %v964, %v964
    %v1052 = vpack.c.bf16 %v966, %v966
    %v1053 = vpack.c.bf16 %v1005, %v1005
    %v1054 = vpack.c.bf16 %v1007, %v1007
    %v1055 = vpack.c.bf16 %v1046, %v1046
    %v1061 = vunpack.c.l.b16 %v1051
    %v1062 = vunpack.c.l.b16 %v1052
    %v1063 = vunpack.c.l.b16 %v1053
    %v1064 = vunpack.c.l.b16 %v1054
    %v1065 = vunpack.c.l.b16 %v1055
    %v1066 = vpack.c.b16 %v1062, %v1061
    %v1067 = vpack.c.b16 %v1064, %v1063
    %v1068 = vpack.c.b16 %v1065, %v1065
    %1072 = vst [vmem:[#allocation2] sm:$0xff] %v1066
    %1073 = vst [vmem:[#allocation2 + $0x8] sm:$0xff] %v1067
    %vm1074 = vcmask 3072
    %1075 = vst.msk [vmem:[#allocation2 + $0x10] sm:$0xf] %vm1074, %v1068
    %vm1076 = vcmask 261120
    %1077 = vst.msk [vmem:[#allocation4] sm:$0xff] %vm1076, %v565
    // Predicated region
    $region42: #{tpu_custom_call.1} parent=1 // pred_check
      _
    $region43: #{tpu_custom_call.1} parent=1 // pred_check_branch
      %1079 = sbr.rel (0) target = $region45
    $region44: #{tpu_custom_call.1} parent=1 // pred_region
      %s1081 = ssub.s32 320, 320
      %1082 = vsyncadd [#allocation3], %s1081
      %s1084 = sshll.u32 [#allocation2], 4
      %s1085 = int_to_ptr.vmem [resolvable:$true] %s1084
      %1087 = dma.vmem_to_hbm [thread:$0]  %s1085, 320, %s10, [#allocation3]
    $region45: #{tpu_custom_call.1} parent=1 // pred_fallthru
      _
    // Predicated region
    $region46: #{tpu_custom_call.1} parent=1 // pred_check
      _
    $region47: #{tpu_custom_call.1} parent=1 // pred_check_branch
      %1089 = sbr.rel (0) target = $region49
    $region48: #{tpu_custom_call.1} parent=1 // pred_region
      %s1091 = ssub.s32 128, 128
      %1092 = vsyncadd [#allocation5], %s1091
      %s1094 = sshll.u32 [#allocation4], 4
      %s1095 = int_to_ptr.vmem [resolvable:$true] %s1094
      %1097 = dma.vmem_to_hbm [thread:$0]  %s1095, 128, %s11, [#allocation5]
    $region49: #{tpu_custom_call.1} parent=1 // pred_fallthru
      _
    // Predicated region
    $region50: #{tpu_custom_call.1} parent=1 // pred_check
      _
    $region51: #{tpu_custom_call.1} parent=1 // pred_check_branch
      %1099 = sbr.rel (0) target = $region53
    $region52: #{tpu_custom_call.1} parent=1 // pred_region
      %1100 = dma.done [#allocation3], 320
    $region53: #{tpu_custom_call.1} parent=1 // pred_fallthru
      _
    // Predicated region
    $region54: #{tpu_custom_call.1} parent=1 // pred_check
      _
    $region55: #{tpu_custom_call.1} parent=1 // pred_check_branch
      %1102 = sbr.rel (0) target = $region57
    $region56: #{tpu_custom_call.1} parent=1 // pred_region
      %1103 = dma.done [#allocation5], 128
    $region57: #{tpu_custom_call.1} parent=1 // pred_fallthru
      _
    %1104 = vsyncpa [#allocation3], 1
    %1105 = vsyncpa [#allocation5], 1

</llo_original>
